<compile_context>
chip_gen: v5e
topology: v5e:2x2
jax: 0.10.0
libtpu: 0.0.40
codegen_flags: <defaults>
</compile_context>

<pallas_src>
import numpy as np
import jax
import jax.numpy as jnp
from jax.experimental import pallas as pl
from jax.experimental.pallas import tpu as pltpu

_LANES = 128  # env-id axis padded to a full lane width


def _round_up(x, m):
    return ((x + m - 1) // m) * m


def _cdiv(a, b):
    return (a + b - 1) // b


def _pick_tile(n, c, in_dtype, tile_n):
    """Auto-size the batch tile from C, dtype and the VMEM budget."""
    try:
        phys_vmem = int(pltpu.get_tpu_info().vmem_capacity_bytes)
    except Exception:
        phys_vmem = 64 * 1024 * 1024  # conservative (v7x-sized) fallback
    vmem_limit = min(phys_vmem // 2, 64 * 1024 * 1024)
    if tile_n is None:
        budget = int(vmem_limit * 0.55)
        in_bytes = jnp.dtype(in_dtype).itemsize
        # Per-row VMEM estimate: double-buffered logits block, ~5 live (tile,C)
        # f32 temporaries, double-buffered lane-padded labels/envs blocks, and
        # the (tile,128) env mask.
        per_row = (2 * c * in_bytes + 5 * c * 4
                   + 2 * 2 * _LANES * 4 + 2 * _LANES * 4)
        tile_n = budget // per_row
    tile = max(8, min(int(tile_n), 4096, _round_up(n, 8)))
    tile = max(8, (tile // 8) * 8)
    return tile, int(vmem_limit)


def _make_kernel(true_n, tile_n, num_classes, with_envs):
    """Build the IRM-loss partial-sums kernel with static config baked in."""

    def kernel(*refs):
        if with_envs:
            (logits_ref, labels_ref, envs_ref,
             sq_out, cnt_out, base_out, base_acc, sq_acc, cnt_acc) = refs
        else:
            (logits_ref, labels_ref,
             sq_out, cnt_out, base_out, base_acc, sq_acc, cnt_acc) = refs
            envs_ref = None

        t = pl.program_id(1)
        n_t = pl.num_programs(1)
        g = pl.program_id(0) * n_t + t          # global (unclamped) tile index

        @pl.when(t == 0)
        def _init():
            base_acc[...] = jnp.zeros_like(base_acc)
            sq_acc[...] = jnp.zeros_like(sq_acc)
            cnt_acc[...] = jnp.zeros_like(cnt_acc)

        x_raw = logits_ref[...].astype(jnp.float32)        # (tile, C)
        labels = labels_ref[...]                           # (tile, 1) int32

        # Row validity: ragged last block / clamped duplicate blocks hold
        # undefined data -> select BEFORE the exp/log path.
        row = g * tile_n + jax.lax.broadcasted_iota(jnp.int32, (tile_n, 1), 0)
        valid = row < true_n                               # (tile, 1) bool
        x = jnp.where(valid, x_raw, 0.0)                   # (tile, C)

        # Label mask from a minimal (1, C) iota (broadcast does the rest).
        col = jax.lax.broadcasted_iota(jnp.int32, (1, num_classes), 1)
        lbl_mask = col == labels                           # (tile, C) bool

        m = jnp.max(x, axis=-1, keepdims=True)             # (tile, 1)
        ex = jnp.exp(x - m)                                # (tile, C)
        ex_off = jnp.where(lbl_mask, 0.0, ex)              # label class zeroed
        picked = jnp.sum(jnp.where(lbl_mask, x, 0.0), axis=-1, keepdims=True)

        sum_off = jnp.sum(ex_off, axis=-1, keepdims=True)          # (tile,1)
        sum_off2 = jnp.sum(ex_off * ex_off, axis=-1, keepdims=True)
        ex_y = jnp.exp(picked - m)                                  # (tile,1)
        sum_ex = sum_off + ex_y
        lse = jnp.log(sum_ex) + m
        nll = jnp.where(valid, lse - picked, 0.0)
        base_acc[...] += jnp.sum(nll, axis=0, keepdims=True)        # (1,1)

        if with_envs:
            # ||softmax - onehot||^2 per row, cancellation-free:
            #   sum_{j!=y} p_j^2 + (1-p_y)^2 = (sum_off2 + sum_off^2) / sum_ex^2
            r = 1.0 / sum_ex                              # exact (tile,1) divide
            sqn = (sum_off2 + sum_off * sum_off) * (r * r)
            sqn = jnp.where(valid, sqn, 0.0)              # (tile, 1)

            envs = envs_ref[...]                          # (tile, 1) int32
            env_lane = jax.lax.broadcasted_iota(jnp.int32, (1, _LANES), 1)
            env_mask = jnp.logical_and(env_lane == envs,
                                       valid).astype(jnp.float32)  # (tile,128)
            sq_acc[...] += jnp.sum(env_mask * sqn, axis=0, keepdims=True)
            cnt_acc[...] += jnp.sum(env_mask, axis=0, keepdims=True)

        # Emit lane-dense per-split partials on the final inner step.
        @pl.when(t == n_t - 1)
        def _finalize():
            ones8 = jnp.ones((1, 8, _LANES), jnp.float32)
            sq_out[...] = sq_acc[...].reshape(1, 1, _LANES) * ones8
            cnt_out[...] = cnt_acc[...].reshape(1, 1, _LANES) * ones8
            base_out[...] = base_acc[...].reshape(1, 1, 1) * ones8

    return kernel


def enhanced_irm_loss(logits, labels, environments=None,
                      penalty_weight=0.1, num_envs=4,
                      tile_n=None, num_splits=2):
    """JAX/Pallas equivalent of EnhancedIRMLoss.forward (returns a scalar)."""
    n, c = logits.shape
    assert num_envs <= _LANES, "num_envs must be <= 128"

    labels2 = jnp.asarray(labels, jnp.int32).reshape(n, 1)
    with_envs = environments is not None
    if with_envs:
        envs2 = jnp.asarray(environments, jnp.int32).reshape(n, 1)

    tile, vmem_limit = _pick_tile(n, c, logits.dtype, tile_n)
    num_tiles = _cdiv(n, tile)
    splits = max(1, min(int(num_splits), num_tiles))   # 2 -> both TCs on v7x
    tiles_per_split = _cdiv(num_tiles, splits)
    last_block = num_tiles - 1

    def blk(s, t):
        # Clamp so DMAs never go fully out of bounds; clamped duplicates are
        # zeroed in-kernel by the row-validity mask.
        return (jnp.minimum(s * tiles_per_split + t, last_block), 0)

    kernel = _make_kernel(true_n=n, tile_n=tile, num_classes=c,
                          with_envs=with_envs)

    in_specs = [pl.BlockSpec((tile, c), blk),        # logits (native dtype)
                pl.BlockSpec((tile, 1), blk)]        # labels
    args = [logits, labels2]
    if with_envs:
        in_specs.append(pl.BlockSpec((tile, 1), blk))  # environments
        args.append(envs2)

    part_shape = jax.ShapeDtypeStruct((splits, 8, _LANES), jnp.float32)
    part_spec = pl.BlockSpec((1, 8, _LANES), lambda s, t: (s, 0, 0))

    sq_p, cnt_p, base_p = pl.pallas_call(
        kernel,
        out_shape=(part_shape, part_shape, part_shape),
        grid_spec=pltpu.PrefetchScalarGridSpec(
            num_scalar_prefetch=0,
            grid=(splits, tiles_per_split),
            in_specs=in_specs,
            out_specs=(part_spec, part_spec, part_spec),
            scratch_shapes=[
                pltpu.VMEM((1, 1), jnp.float32),        # base-loss running sum
                pltpu.VMEM((1, _LANES), jnp.float32),   # per-env sq-norm sums
                pltpu.VMEM((1, _LANES), jnp.float32),   # per-env counts
            ],
        ),
        compiler_params=pltpu.CompilerParams(
            dimension_semantics=("parallel", "arbitrary"),
            vmem_limit_bytes=vmem_limit),
    )(*args)

    # Tiny epilogue in plain JAX (combines per-split / per-core partials).
    base = jnp.sum(base_p[:, 0, 0]) / jnp.float32(n)
    if not with_envs:
        return base

    sq = jnp.sum(sq_p[:, 0, :], axis=0)          # (128,)
    cnt = jnp.sum(cnt_p[:, 0, :], axis=0)        # (128,)
    lane = jnp.arange(_LANES)
    present = jnp.logical_and(cnt > 0.5, lane < num_envs)
    k = jnp.sum(present.astype(jnp.float32))
    grad_norms = jnp.where(present, jnp.sqrt(sq) / jnp.maximum(cnt, 1.0), 0.0)
    mean = jnp.sum(grad_norms) / jnp.maximum(k, 1.0)
    var = (jnp.sum(jnp.where(present, (grad_norms - mean) ** 2, 0.0))
           / jnp.maximum(k - 1.0, 1.0))
    var = jnp.where(k > 1.0, var, 0.0)           # <2 envs -> no penalty
    return base + jnp.float32(penalty_weight) * var


def _reference_numpy(logits, labels, environments, penalty_weight):
    """Pure numpy (float64) reference mirroring the PyTorch forward."""
    x = np.asarray(logits, np.float64)
    y = np.asarray(labels, np.int64)
    m = x.max(-1, keepdims=True)
    ex = np.exp(x - m)
    p = ex / ex.sum(-1, keepdims=True)
    lse = np.log(ex.sum(-1, keepdims=True)) + m
    nll = lse[:, 0] - x[np.arange(len(y)), y]
    base = nll.mean()
    if environments is None:
        return base
    e = np.asarray(environments, np.int64)
    eye = np.eye(x.shape[1])
    grad_norms = []
    for env in np.unique(e):
        mask = e == env
        ne = int(mask.sum())
        if ne > 0:
            g = (p[mask] - eye[y[mask]]) / ne
            grad_norms.append(np.linalg.norm(g))
    if len(grad_norms) > 1:
        gn = np.array(grad_norms)
        return base + penalty_weight * gn.var(ddof=1)
    return base


if __name__ == "__main__":
    key = jax.random.PRNGKey(0)
    k1, k2, k3 = jax.random.split(key, 3)

    # Small but multi-tile + ragged: tile_n=8 -> 3 tiles (4 masked rows),
    # 2 grid splits (the second split gets one real and one clamped tile).
    N, C, NUM_ENVS = 20, 32, 4
    logits = jax.random.normal(k1, (N, C), dtype=jnp.float32)
    labels = jax.random.randint(k2, (N,), 0, C, dtype=jnp.int32)
    environments = jax.random.randint(k3, (N,), 0, NUM_ENVS, dtype=jnp.int32)

    loss = jax.block_until_ready(
        enhanced_irm_loss(logits, labels, environments,
                          penalty_weight=0.1, num_envs=NUM_ENVS, tile_n=8))
    ref = _reference_numpy(np.asarray(logits), np.asarray(labels),
                           np.asarray(environments), 0.1)
    assert np.isfinite(float(loss))
    np.testing.assert_allclose(float(loss), ref, rtol=1e-5, atol=1e-6)

    # Base-only path (environments=None).
    base_only = jax.block_until_ready(
        enhanced_irm_loss(logits, labels, None,
                          penalty_weight=0.1, num_envs=NUM_ENVS, tile_n=8))
    ref_base = _reference_numpy(np.asarray(logits), np.asarray(labels), None, 0.1)
    np.testing.assert_allclose(float(base_only), ref_base, rtol=1e-5, atol=1e-7)

    # Confident-prediction case: exercises the cancellation-free ||p-onehot||^2.
    loss_conf = jax.block_until_ready(
        enhanced_irm_loss(logits * 8.0, labels, environments,
                          penalty_weight=0.1, num_envs=NUM_ENVS, tile_n=8))
    ref_conf = _reference_numpy(np.asarray(logits) * 8.0, np.asarray(labels),
                                np.asarray(environments), 0.1)
    np.testing.assert_allclose(float(loss_conf), ref_conf, rtol=1e-4, atol=1e-6)

    # Auto-tile path (single tile / single split), exercises VMEM auto-sizing.
    loss_auto = jax.block_until_ready(
        enhanced_irm_loss(logits, labels, environments,
                          penalty_weight=0.1, num_envs=NUM_ENVS))
    np.testing.assert_allclose(float(loss_auto), ref, rtol=1e-5, atol=1e-6)

    print("KERNEL_OK")
</pallas_src>

<mosaic_0001>
module attributes {stable_mosaic.version = 11 : i64} {
  func.func @kernel(%arg0: i32, %arg1: i32, %arg2: memref<8x32xf32, #tpu.memory_space<vmem>>, %arg3: memref<8x1xi32, #tpu.memory_space<vmem>>, %arg4: memref<8x1xi32, #tpu.memory_space<vmem>>, %arg5: memref<1x8x128xf32, #tpu.memory_space<vmem>>, %arg6: memref<1x8x128xf32, #tpu.memory_space<vmem>>, %arg7: memref<1x8x128xf32, #tpu.memory_space<vmem>>, %arg8: memref<1x1xf32, #tpu.memory_space<vmem>>, %arg9: memref<1x128xf32, #tpu.memory_space<vmem>>, %arg10: memref<1x128xf32, #tpu.memory_space<vmem>>) attributes {dimension_semantics = [#tpu.dimension_semantics<parallel>, #tpu.dimension_semantics<arbitrary>], iteration_bounds = array<i64: 2, 2>, scalar_prefetch = 0 : i64, scratch_operands = 3 : i64, tpu.core_type = #tpu.core_type<tc>, window_params = [{transform_indices = @transform_0, window_bounds = array<i64: 8, 32>}, {transform_indices = @transform_1, window_bounds = array<i64: 8, 1>}, {transform_indices = @transform_2, window_bounds = array<i64: 8, 1>}, {transform_indices = @transform_3, window_bounds = array<i64: 1, 8, 128>}, {transform_indices = @transform_4, window_bounds = array<i64: 1, 8, 128>}, {transform_indices = @transform_5, window_bounds = array<i64: 1, 8, 128>}]} {
    %c2_i32 = arith.constant 2 : i32
    %0 = arith.muli %arg0, %c2_i32 : i32
    %1 = arith.addi %0, %arg1 : i32
    %c0_i32 = arith.constant 0 : i32
    %2 = arith.cmpi eq, %arg1, %c0_i32 : i32
    %3 = arith.extui %2 : i1 to i32
    %c0_i32_0 = arith.constant 0 : i32
    %4 = arith.cmpi ne, %3, %c0_i32_0 : i32
    scf.if %4 {
      %cst_31 = arith.constant 0.000000e+00 : f32
      %82 = vector.broadcast %cst_31 : f32 to vector<1x1xf32>
      %c0_32 = arith.constant 0 : index
      %c0_33 = arith.constant 0 : index
      %83 = vector.load %arg8[%c0_32, %c0_33] : memref<1x1xf32, #tpu.memory_space<vmem>>, vector<1x1xf32>
      tpu.vector_store %arg8[%c0_32, %c0_33], %82 {strides = array<i32>} : memref<1x1xf32, #tpu.memory_space<vmem>>, vector<1x1xf32>,
      %cst_34 = arith.constant 0.000000e+00 : f32
      %84 = vector.broadcast %cst_34 : f32 to vector<1x128xf32>
      %c0_35 = arith.constant 0 : index
      %c0_36 = arith.constant 0 : index
      %85 = vector.load %arg9[%c0_35, %c0_36] : memref<1x128xf32, #tpu.memory_space<vmem>>, vector<1x128xf32>
      tpu.vector_store %arg9[%c0_35, %c0_36], %84 {strides = array<i32>} : memref<1x128xf32, #tpu.memory_space<vmem>>, vector<1x128xf32>,
      %cst_37 = arith.constant 0.000000e+00 : f32
      %86 = vector.broadcast %cst_37 : f32 to vector<1x128xf32>
      %c0_38 = arith.constant 0 : index
      %c0_39 = arith.constant 0 : index
      %87 = vector.load %arg10[%c0_38, %c0_39] : memref<1x128xf32, #tpu.memory_space<vmem>>, vector<1x128xf32>
      tpu.vector_store %arg10[%c0_38, %c0_39], %86 {strides = array<i32>} : memref<1x128xf32, #tpu.memory_space<vmem>>, vector<1x128xf32>,
    } else {
    }
    %c0 = arith.constant 0 : index
    %c0_1 = arith.constant 0 : index
    %5 = vector.load %arg2[%c0, %c0_1] : memref<8x32xf32, #tpu.memory_space<vmem>>, vector<8x32xf32>
    %c0_2 = arith.constant 0 : index
    %c0_3 = arith.constant 0 : index
    %6 = vector.load %arg3[%c0_2, %c0_3] : memref<8x1xi32, #tpu.memory_space<vmem>>, vector<8x1xi32>
    %c8_i32 = arith.constant 8 : i32
    %7 = arith.muli %1, %c8_i32 : i32
    %8 = tpu.iota {dimensions = array<i32: 0>} : vector<8x1xi32>
    %9 = vector.broadcast %7 : i32 to vector<8x1xi32>
    %10 = arith.addi %9, %8 : vector<8x1xi32>
    %c20_i32 = arith.constant 20 : i32
    %11 = vector.broadcast %c20_i32 : i32 to vector<8x1xi32>
    %12 = arith.cmpi slt, %10, %11 : vector<8x1xi32>
    %cst = arith.constant 0.000000e+00 : f32
    %13 = vector.shape_cast %12 : vector<8x1xi1> to vector<8x1xi1>
    %14 = vector.broadcast %13 : vector<8x1xi1> to vector<8x32xi1>
    %15 = vector.broadcast %cst : f32 to vector<8x32xf32>
    %16 = arith.select %14, %5, %15 : vector<8x32xi1>, vector<8x32xf32>
    %17 = tpu.iota {dimensions = array<i32: 1>} : vector<1x32xi32>
    %18 = vector.broadcast %17 : vector<1x32xi32> to vector<8x32xi32>
    %19 = vector.broadcast %6 : vector<8x1xi32> to vector<8x32xi32>
    %20 = arith.cmpi eq, %18, %19 : vector<8x32xi32>
    %cst_4 = arith.constant dense<0xFF800000> : vector<8xf32>
    %21 = vector.multi_reduction <maximumf>, %16, %cst_4 [1] : vector<8x32xf32> to vector<8xf32>
    %22 = vector.shape_cast %21 : vector<8xf32> to vector<8x1xf32>
    %23 = vector.broadcast %22 : vector<8x1xf32> to vector<8x32xf32>
    %24 = arith.subf %16, %23 : vector<8x32xf32>
    %25 = math.exp %24 : vector<8x32xf32>
    %cst_5 = arith.constant 0.000000e+00 : f32
    %26 = vector.broadcast %cst_5 : f32 to vector<8x32xf32>
    %27 = arith.select %20, %26, %25 : vector<8x32xi1>, vector<8x32xf32>
    %cst_6 = arith.constant 0.000000e+00 : f32
    %28 = vector.broadcast %cst_6 : f32 to vector<8x32xf32>
    %29 = arith.select %20, %16, %28 : vector<8x32xi1>, vector<8x32xf32>
    %cst_7 = arith.constant dense<0.000000e+00> : vector<8xf32>
    %30 = vector.multi_reduction <add>, %29, %cst_7 [1] : vector<8x32xf32> to vector<8xf32>
    %31 = vector.shape_cast %30 : vector<8xf32> to vector<8x1xf32>
    %cst_8 = arith.constant dense<0.000000e+00> : vector<8xf32>
    %32 = vector.multi_reduction <add>, %27, %cst_8 [1] : vector<8x32xf32> to vector<8xf32>
    %33 = vector.shape_cast %32 : vector<8xf32> to vector<8x1xf32>
    %34 = arith.mulf %27, %27 : vector<8x32xf32>
    %cst_9 = arith.constant dense<0.000000e+00> : vector<8xf32>
    %35 = vector.multi_reduction <add>, %34, %cst_9 [1] : vector<8x32xf32> to vector<8xf32>
    %36 = vector.shape_cast %35 : vector<8xf32> to vector<8x1xf32>
    %37 = arith.subf %31, %22 : vector<8x1xf32>
    %38 = math.exp %37 : vector<8x1xf32>
    %39 = arith.addf %33, %38 : vector<8x1xf32>
    %40 = math.log %39 : vector<8x1xf32>
    %41 = arith.addf %40, %22 : vector<8x1xf32>
    %42 = arith.subf %41, %31 : vector<8x1xf32>
    %cst_10 = arith.constant 0.000000e+00 : f32
    %43 = vector.broadcast %cst_10 : f32 to vector<8x1xf32>
    %44 = arith.select %12, %42, %43 : vector<8x1xi1>, vector<8x1xf32>
    %c0_11 = arith.constant 0 : index
    %c0_12 = arith.constant 0 : index
    %45 = vector.load %arg8[%c0_11, %c0_12] : memref<1x1xf32, #tpu.memory_space<vmem>>, vector<1x1xf32>
    %cst_13 = arith.constant dense<0.000000e+00> : vector<1xf32>
    %46 = vector.multi_reduction <add>, %44, %cst_13 [0] : vector<8x1xf32> to vector<1xf32>
    %47 = vector.shape_cast %46 : vector<1xf32> to vector<1x1xf32>
    %48 = arith.addf %45, %47 : vector<1x1xf32>
    %c0_14 = arith.constant 0 : index
    %c0_15 = arith.constant 0 : index
    %49 = vector.load %arg8[%c0_14, %c0_15] : memref<1x1xf32, #tpu.memory_space<vmem>>, vector<1x1xf32>
    tpu.vector_store %arg8[%c0_14, %c0_15], %48 {strides = array<i32>} : memref<1x1xf32, #tpu.memory_space<vmem>>, vector<1x1xf32>,
    %cst_16 = arith.constant 1.000000e+00 : f32
    %50 = vector.broadcast %cst_16 : f32 to vector<8x1xf32>
    %51 = arith.divf %50, %39 : vector<8x1xf32>
    %52 = arith.mulf %33, %33 : vector<8x1xf32>
    %53 = arith.addf %36, %52 : vector<8x1xf32>
    %54 = arith.mulf %51, %51 : vector<8x1xf32>
    %55 = arith.mulf %53, %54 : vector<8x1xf32>
    %cst_17 = arith.constant 0.000000e+00 : f32
    %56 = vector.broadcast %cst_17 : f32 to vector<8x1xf32>
    %57 = arith.select %12, %55, %56 : vector<8x1xi1>, vector<8x1xf32>
    %c0_18 = arith.constant 0 : index
    %c0_19 = arith.constant 0 : index
    %58 = vector.load %arg4[%c0_18, %c0_19] : memref<8x1xi32, #tpu.memory_space<vmem>>, vector<8x1xi32>
    %59 = tpu.iota {dimensions = array<i32: 1>} : vector<1x128xi32>
    %60 = vector.broadcast %59 : vector<1x128xi32> to vector<8x128xi32>
    %61 = vector.broadcast %58 : vector<8x1xi32> to vector<8x128xi32>
    %62 = arith.cmpi eq, %60, %61 : vector<8x128xi32>
    %63 = vector.broadcast %12 : vector<8x1xi1> to vector<8x128xi1>
    %64 = arith.andi %62, %63 : vector<8x128xi1>
    %65 = arith.extui %64 : vector<8x128xi1> to vector<8x128xi32>
    %66 = arith.sitofp %65 : vector<8x128xi32> to vector<8x128xf32>
    %c0_20 = arith.constant 0 : index
    %c0_21 = arith.constant 0 : index
    %67 = vector.load %arg9[%c0_20, %c0_21] : memref<1x128xf32, #tpu.memory_space<vmem>>, vector<1x128xf32>
    %68 = vector.broadcast %57 : vector<8x1xf32> to vector<8x128xf32>
    %69 = arith.mulf %66, %68 : vector<8x128xf32>
    %cst_22 = arith.constant dense<0.000000e+00> : vector<128xf32>
    %70 = vector.multi_reduction <add>, %69, %cst_22 [0] : vector<8x128xf32> to vector<128xf32>
    %71 = vector.shape_cast %70 : vector<128xf32> to vector<1x128xf32>
    %72 = arith.addf %67, %71 : vector<1x128xf32>
    %c0_23 = arith.constant 0 : index
    %c0_24 = arith.constant 0 : index
    %73 = vector.load %arg9[%c0_23, %c0_24] : memref<1x128xf32, #tpu.memory_space<vmem>>, vector<1x128xf32>
    tpu.vector_store %arg9[%c0_23, %c0_24], %72 {strides = array<i32>} : memref<1x128xf32, #tpu.memory_space<vmem>>, vector<1x128xf32>,
    %c0_25 = arith.constant 0 : index
    %c0_26 = arith.constant 0 : index
    %74 = vector.load %arg10[%c0_25, %c0_26] : memref<1x128xf32, #tpu.memory_space<vmem>>, vector<1x128xf32>
    %cst_27 = arith.constant dense<0.000000e+00> : vector<128xf32>
    %75 = vector.multi_reduction <add>, %66, %cst_27 [0] : vector<8x128xf32> to vector<128xf32>
    %76 = vector.shape_cast %75 : vector<128xf32> to vector<1x128xf32>
    %77 = arith.addf %74, %76 : vector<1x128xf32>
    %c0_28 = arith.constant 0 : index
    %c0_29 = arith.constant 0 : index
    %78 = vector.load %arg10[%c0_28, %c0_29] : memref<1x128xf32, #tpu.memory_space<vmem>>, vector<1x128xf32>
    tpu.vector_store %arg10[%c0_28, %c0_29], %77 {strides = array<i32>} : memref<1x128xf32, #tpu.memory_space<vmem>>, vector<1x128xf32>,
    %c1_i32 = arith.constant 1 : i32
    %79 = arith.cmpi eq, %arg1, %c1_i32 : i32
    %80 = arith.extui %79 : i1 to i32
    %c0_i32_30 = arith.constant 0 : i32
    %81 = arith.cmpi ne, %80, %c0_i32_30 : i32
    scf.if %81 {
      %cst_31 = arith.constant 1.000000e+00 : f32
      %82 = vector.broadcast %cst_31 : f32 to vector<1x8x128xf32>
      %c0_32 = arith.constant 0 : index
      %c0_33 = arith.constant 0 : index
      %83 = vector.load %arg9[%c0_32, %c0_33] : memref<1x128xf32, #tpu.memory_space<vmem>>, vector<1x128xf32>
      %84 = vector.shape_cast %83 : vector<1x128xf32> to vector<1x1x128xf32>
      %85 = vector.broadcast %84 : vector<1x1x128xf32> to vector<1x8x128xf32>
      %86 = arith.mulf %85, %82 : vector<1x8x128xf32>
      %c0_34 = arith.constant 0 : index
      %c0_35 = arith.constant 0 : index
      %c0_36 = arith.constant 0 : index
      %87 = vector.load %arg5[%c0_34, %c0_35, %c0_36] : memref<1x8x128xf32, #tpu.memory_space<vmem>>, vector<1x8x128xf32>
      tpu.vector_store %arg5[%c0_34, %c0_35, %c0_36], %86 {strides = array<i32>} : memref<1x8x128xf32, #tpu.memory_space<vmem>>, vector<1x8x128xf32>,
      %c0_37 = arith.constant 0 : index
      %c0_38 = arith.constant 0 : index
      %88 = vector.load %arg10[%c0_37, %c0_38] : memref<1x128xf32, #tpu.memory_space<vmem>>, vector<1x128xf32>
      %89 = vector.shape_cast %88 : vector<1x128xf32> to vector<1x1x128xf32>
      %90 = vector.broadcast %89 : vector<1x1x128xf32> to vector<1x8x128xf32>
      %91 = arith.mulf %90, %82 : vector<1x8x128xf32>
      %c0_39 = arith.constant 0 : index
      %c0_40 = arith.constant 0 : index
      %c0_41 = arith.constant 0 : index
      %92 = vector.load %arg6[%c0_39, %c0_40, %c0_41] : memref<1x8x128xf32, #tpu.memory_space<vmem>>, vector<1x8x128xf32>
      tpu.vector_store %arg6[%c0_39, %c0_40, %c0_41], %91 {strides = array<i32>} : memref<1x8x128xf32, #tpu.memory_space<vmem>>, vector<1x8x128xf32>,
      %c0_42 = arith.constant 0 : index
      %c0_43 = arith.constant 0 : index
      %93 = vector.load %arg8[%c0_42, %c0_43] : memref<1x1xf32, #tpu.memory_space<vmem>>, vector<1x1xf32>
      %94 = vector.shape_cast %93 : vector<1x1xf32> to vector<1x1x1xf32>
      %95 = vector.broadcast %94 : vector<1x1x1xf32> to vector<1x8x128xf32>
      %96 = arith.mulf %95, %82 : vector<1x8x128xf32>
      %c0_44 = arith.constant 0 : index
      %c0_45 = arith.constant 0 : index
      %c0_46 = arith.constant 0 : index
      %97 = vector.load %arg7[%c0_44, %c0_45, %c0_46] : memref<1x8x128xf32, #tpu.memory_space<vmem>>, vector<1x8x128xf32>
      tpu.vector_store %arg7[%c0_44, %c0_45, %c0_46], %96 {strides = array<i32>} : memref<1x8x128xf32, #tpu.memory_space<vmem>>, vector<1x8x128xf32>,
    } else {
    }
    return
  }
  func.func @transform_0(%arg0: i32, %arg1: i32) -> (i32, i32) {
    %c2_i32 = arith.constant 2 : i32
    %0 = arith.muli %arg0, %c2_i32 : i32
    %1 = arith.addi %0, %arg1 : i32
    %c2_i32_0 = arith.constant 2 : i32
    %2 = arith.minsi %1, %c2_i32_0 : i32
    %c0_i32 = arith.constant 0 : i32
    %c0_i32_1 = arith.constant 0 : i32
    return %2, %c0_i32 : i32, i32
  }
  func.func @transform_1(%arg0: i32, %arg1: i32) -> (i32, i32) {
    %c2_i32 = arith.constant 2 : i32
    %0 = arith.muli %arg0, %c2_i32 : i32
    %1 = arith.addi %0, %arg1 : i32
    %c2_i32_0 = arith.constant 2 : i32
    %2 = arith.minsi %1, %c2_i32_0 : i32
    %c0_i32 = arith.constant 0 : i32
    %c0_i32_1 = arith.constant 0 : i32
    return %2, %c0_i32 : i32, i32
  }
  func.func @transform_2(%arg0: i32, %arg1: i32) -> (i32, i32) {
    %c2_i32 = arith.constant 2 : i32
    %0 = arith.muli %arg0, %c2_i32 : i32
    %1 = arith.addi %0, %arg1 : i32
    %c2_i32_0 = arith.constant 2 : i32
    %2 = arith.minsi %1, %c2_i32_0 : i32
    %c0_i32 = arith.constant 0 : i32
    %c0_i32_1 = arith.constant 0 : i32
    return %2, %c0_i32 : i32, i32
  }
  func.func @transform_3(%arg0: i32, %arg1: i32) -> (i32, i32, i32) {
    %c0_i32 = arith.constant 0 : i32
    %c0_i32_0 = arith.constant 0 : i32
    %c0_i32_1 = arith.constant 0 : i32
    return %arg0, %c0_i32, %c0_i32_0 : i32, i32, i32
  }
  func.func @transform_4(%arg0: i32, %arg1: i32) -> (i32, i32, i32) {
    %c0_i32 = arith.constant 0 : i32
    %c0_i32_0 = arith.constant 0 : i32
    %c0_i32_1 = arith.constant 0 : i32
    return %arg0, %c0_i32, %c0_i32_0 : i32, i32, i32
  }
  func.func @transform_5(%arg0: i32, %arg1: i32) -> (i32, i32, i32) {
    %c0_i32 = arith.constant 0 : i32
    %c0_i32_0 = arith.constant 0 : i32
    %c0_i32_1 = arith.constant 0 : i32
    return %arg0, %c0_i32, %c0_i32_0 : i32, i32, i32
  }
}

</mosaic_0001>

<llo_original>
// kernel: tpu_custom_call.1
$region0: #{tpu_custom_call.1}
  #allocation0 [shape = 'u32[]', space=smem, size = 0x4, offset = 0x4, fixed_abs, tag = 'smem constant byte address 0x4 - core index']
  #allocation1 [shape = 'u32[72,128]{1,0:T(1,128)}', space=vmem, size = 0x9000, scoped, tag = 'internal scratch']
  #allocation2 [shape = 'f32[1,1]{1,0:T(1,128)}', space=vmem, size = 0x200, scoped, tag = 'scratch operand']
  #allocation3 [shape = 'f32[1,128]{1,0:T(1,128)}', space=vmem, size = 0x200, scoped, tag = 'scratch operand']
  #allocation4 [shape = 'f32[1,128]{1,0:T(1,128)}', space=vmem, size = 0x200, scoped, tag = 'scratch operand']
  %s0 = inlined_call_operand.vmem [shape: f32[20,32], index: 0, kind: input, shape index: {}]
  %s1 = inlined_call_operand.vmem [shape: s32[20,1], index: 1, kind: input, shape index: {}]
  %s2 = inlined_call_operand.vmem [shape: s32[20,1], index: 2, kind: input, shape index: {}]
  %s3 = inlined_call_operand.hbm [shape: f32[2,8,128], index: 3, kind: output, shape index: {0}]
  %s4 = inlined_call_operand.hbm [shape: f32[2,8,128], index: 4, kind: output, shape index: {1}]
  %s5 = inlined_call_operand.hbm [shape: f32[2,8,128], index: 5, kind: output, shape index: {2}]
  %6 = xla_tuple %s3, %s4, %s5
  %s7 = sld [smem:[#allocation0]]
  $region69: #{tpu_custom_call.1} parent=0
    _
  %s9 = ssub.s32 1, %s7
  %s10 = scalar_select 0, %s9, %s7
  $region1: #{tpu_custom_call.1} parent=0
    #allocation5 [shape = 'u8[8192]{0}', space=vmem, size = 0x2000, scoped, tag = 'output window, operand 0']
    #allocation6 [shape = 's32[2]{0}', space=sflag, size = 0x8, scoped, tag = 'scoped memory for tpu_custom_call.1']
    #allocation7 [shape = 'u8[8192]{0}', space=vmem, size = 0x2000, scoped, tag = 'output window, operand 1']
    #allocation8 [shape = 's32[2]{0}', space=sflag, size = 0x8, scoped, tag = 'scoped memory for tpu_custom_call.1']
    #allocation9 [shape = 'u8[8192]{0}', space=vmem, size = 0x2000, scoped, tag = 'output window, operand 2']
    %11 = vsyncpa [#allocation6], 0
    %s12 = scalar_lea.sflag [#allocation6], 1
    %13 = vsyncpa %s12, 0
    %14 = vsyncpa [#allocation8], 0
    %s15 = scalar_lea.sflag [#allocation8], 1
    %16 = vsyncpa %s15, 0
    loop: start=0, step=1, limit=6
    $region2: #{tpu_custom_call.1} parent=1 // loop_pre_header
      _
    $region3: #{tpu_custom_call.1} parent=1 // loop_header
      %s18 = sphi 0, %s22
      %p19 = scmp.ge.s32.totalorder %s18, 6
      %s25 = sphi 0, %s37
      %s26 = sphi 0, %s33
      %s27 = sphi 0, %s25
      %s28 = sphi 0, %s26
      %s29 = sphi 0, %s27
      %s30 = sphi 0, %s28
      %s48 = sphi 0, %s50
      %s51 = sphi 0, %s48
      %s52 = sphi 0, %s51
      %s68 = sphi 0, %s52
      %s82 = sphi 0, %s84
      %s85 = sphi 0, %s82
      %s86 = sphi 0, %s85
      %s102 = sphi 0, %s86
      %s116 = sphi 0, %s118
      %s119 = sphi 0, %s116
      %s120 = sphi 0, %s119
      %s136 = sphi 0, %s120
      %s142 = sphi 0, %s144
      %s145 = sphi 0, %s142
      %s146 = sphi 0, %s145
      %s162 = sphi 0, %s146
      %s168 = sphi 0, %s170
      %s171 = sphi 0, %s168
      %s172 = sphi 0, %s171
      %s188 = sphi 0, %s172
      %s194 = sphi 0, %s196
      %s197 = sphi 0, %s194
      %s198 = sphi 0, %s197
      %s214 = sphi 0, %s198
    $region4: #{tpu_custom_call.1} parent=1 // loop_header_branch
      %21 = sbr.rel (%p19) target = $region8
    $region5: #{tpu_custom_call.1} parent=1 // loop_body
      %s23 = ssub.s32 %s18, 1
      %s24 = ssub.s32 %s18, 2
      %s31 = sadd.s32 1, %s26
      %p32 = scmp.ge.s32.totalorder %s31, 2
      %s33 = scalar_select %p32, 0, %s31
      %s34 = sadd.s32 1, %s25
      %s35 = scalar_select %p32, %s34, %s25
      %p36 = scmp.ge.s32.totalorder %s35, 2
      %s37 = scalar_select %p36, 0, %s35
      %s38 = smul.u32 %s25, 2
      %s39 = sadd.s32 %s38, %s26
      %p40 = scmp.lt.s32.totalorder %s39, 2
      %s41 = scalar_select %p40, %s39, 2
      %s42 = smul.u32 %s37, 2
      %s43 = sadd.s32 %s42, %s33
      %p44 = scmp.lt.s32.totalorder %s43, 2
      %s45 = scalar_select %p44, %s43, 2
      %s46 = ssub.s32 %s41, %s45
      %p47 = scmp.eq.s32.totalorder %s46, 0
      %s49 = sadd.s32 %s48, 1
      %s50 = scalar_select %p47, %s48, %s49
      %p53 = pneg %p47
      %p54 = scmp.eq.s32.totalorder %s18, 3
      %p55 = por %p53, %p54
      %p56 = scmp.ne.s32.totalorder %s48, %s51
      %p57 = scmp.eq.s32.totalorder %s18, 0
      %p58 = por %p56, %p57
      %p59 = scmp.ne.s32.totalorder %s48, %s51
      %p60 = scmp.eq.s32.totalorder %s23, 3
      %p61 = por %p59, %p60
      %p62 = scmp.ne.s32.totalorder %s51, %s52
      %p63 = scmp.eq.s32.totalorder %s23, 0
      %p64 = por %p62, %p63
      %p65 = scmp.ne.s32.totalorder %s51, %s52
      %p66 = scmp.eq.s32.totalorder %s24, 3
      %p67 = por %p65, %p66
      %p69 = scmp.ne.s32.totalorder %s52, %s68
      %p70 = scmp.eq.s32.totalorder %s24, 0
      %p71 = por %p69, %p70
      %s72 = smul.u32 %s25, 2
      %s73 = sadd.s32 %s72, %s26
      %p74 = scmp.lt.s32.totalorder %s73, 2
      %s75 = scalar_select %p74, %s73, 2
      %s76 = smul.u32 %s37, 2
      %s77 = sadd.s32 %s76, %s33
      %p78 = scmp.lt.s32.totalorder %s77, 2
      %s79 = scalar_select %p78, %s77, 2
      %s80 = ssub.s32 %s75, %s79
      %p81 = scmp.eq.s32.totalorder %s80, 0
      %s83 = sadd.s32 %s82, 1
      %s84 = scalar_select %p81, %s82, %s83
      %p87 = pneg %p81
      %p88 = scmp.eq.s32.totalorder %s18, 3
      %p89 = por %p87, %p88
      %p90 = scmp.ne.s32.totalorder %s82, %s85
      %p91 = scmp.eq.s32.totalorder %s18, 0
      %p92 = por %p90, %p91
      %p93 = scmp.ne.s32.totalorder %s82, %s85
      %p94 = scmp.eq.s32.totalorder %s23, 3
      %p95 = por %p93, %p94
      %p96 = scmp.ne.s32.totalorder %s85, %s86
      %p97 = scmp.eq.s32.totalorder %s23, 0
      %p98 = por %p96, %p97
      %p99 = scmp.ne.s32.totalorder %s85, %s86
      %p100 = scmp.eq.s32.totalorder %s24, 3
      %p101 = por %p99, %p100
      %p103 = scmp.ne.s32.totalorder %s86, %s102
      %p104 = scmp.eq.s32.totalorder %s24, 0
      %p105 = por %p103, %p104
      %s106 = smul.u32 %s25, 2
      %s107 = sadd.s32 %s106, %s26
      %p108 = scmp.lt.s32.totalorder %s107, 2
      %s109 = scalar_select %p108, %s107, 2
      %s110 = smul.u32 %s37, 2
      %s111 = sadd.s32 %s110, %s33
      %p112 = scmp.lt.s32.totalorder %s111, 2
      %s113 = scalar_select %p112, %s111, 2
      %s114 = ssub.s32 %s109, %s113
      %p115 = scmp.eq.s32.totalorder %s114, 0
      %s117 = sadd.s32 %s116, 1
      %s118 = scalar_select %p115, %s116, %s117
      %p121 = pneg %p115
      %p122 = scmp.eq.s32.totalorder %s18, 3
      %p123 = por %p121, %p122
      %p124 = scmp.ne.s32.totalorder %s116, %s119
      %p125 = scmp.eq.s32.totalorder %s18, 0
      %p126 = por %p124, %p125
      %p127 = scmp.ne.s32.totalorder %s116, %s119
      %p128 = scmp.eq.s32.totalorder %s23, 3
      %p129 = por %p127, %p128
      %p130 = scmp.ne.s32.totalorder %s119, %s120
      %p131 = scmp.eq.s32.totalorder %s23, 0
      %p132 = por %p130, %p131
      %p133 = scmp.ne.s32.totalorder %s119, %s120
      %p134 = scmp.eq.s32.totalorder %s24, 3
      %p135 = por %p133, %p134
      %p137 = scmp.ne.s32.totalorder %s120, %s136
      %p138 = scmp.eq.s32.totalorder %s24, 0
      %p139 = por %p137, %p138
      %s140 = ssub.s32 %s25, %s37
      %p141 = scmp.eq.s32.totalorder %s140, 0
      %s143 = sadd.s32 %s142, 1
      %s144 = scalar_select %p141, %s142, %s143
      %p147 = pneg %p141
      %p148 = scmp.eq.s32.totalorder %s18, 3
      %p149 = por %p147, %p148
      %p150 = scmp.ne.s32.totalorder %s142, %s145
      %p151 = scmp.eq.s32.totalorder %s18, 0
      %p152 = por %p150, %p151
      %p153 = scmp.ne.s32.totalorder %s142, %s145
      %p154 = scmp.eq.s32.totalorder %s23, 3
      %p155 = por %p153, %p154
      %p156 = scmp.ne.s32.totalorder %s145, %s146
      %p157 = scmp.eq.s32.totalorder %s23, 0
      %p158 = por %p156, %p157
      %p159 = scmp.ne.s32.totalorder %s145, %s146
      %p160 = scmp.eq.s32.totalorder %s24, 3
      %p161 = por %p159, %p160
      %p163 = scmp.ne.s32.totalorder %s146, %s162
      %p164 = scmp.eq.s32.totalorder %s24, 0
      %p165 = por %p163, %p164
      %s166 = ssub.s32 %s25, %s37
      %p167 = scmp.eq.s32.totalorder %s166, 0
      %s169 = sadd.s32 %s168, 1
      %s170 = scalar_select %p167, %s168, %s169
      %p173 = pneg %p167
      %p174 = scmp.eq.s32.totalorder %s18, 3
      %p175 = por %p173, %p174
      %p176 = scmp.ne.s32.totalorder %s168, %s171
      %p177 = scmp.eq.s32.totalorder %s18, 0
      %p178 = por %p176, %p177
      %p179 = scmp.ne.s32.totalorder %s168, %s171
      %p180 = scmp.eq.s32.totalorder %s23, 3
      %p181 = por %p179, %p180
      %p182 = scmp.ne.s32.totalorder %s171, %s172
      %p183 = scmp.eq.s32.totalorder %s23, 0
      %p184 = por %p182, %p183
      %p185 = scmp.ne.s32.totalorder %s171, %s172
      %p186 = scmp.eq.s32.totalorder %s24, 3
      %p187 = por %p185, %p186
      %p189 = scmp.ne.s32.totalorder %s172, %s188
      %p190 = scmp.eq.s32.totalorder %s24, 0
      %p191 = por %p189, %p190
      %s192 = ssub.s32 %s25, %s37
      %p193 = scmp.eq.s32.totalorder %s192, 0
      %s195 = sadd.s32 %s194, 1
      %s196 = scalar_select %p193, %s194, %s195
      %p199 = pneg %p193
      %p200 = scmp.eq.s32.totalorder %s18, 3
      %p201 = por %p199, %p200
      %p202 = scmp.ne.s32.totalorder %s194, %s197
      %p203 = scmp.eq.s32.totalorder %s18, 0
      %p204 = por %p202, %p203
      %p205 = scmp.ne.s32.totalorder %s194, %s197
      %p206 = scmp.eq.s32.totalorder %s23, 3
      %p207 = por %p205, %p206
      %p208 = scmp.ne.s32.totalorder %s197, %s198
      %p209 = scmp.eq.s32.totalorder %s23, 0
      %p210 = por %p208, %p209
      %p211 = scmp.ne.s32.totalorder %s197, %s198
      %p212 = scmp.eq.s32.totalorder %s24, 3
      %p213 = por %p211, %p212
      %p215 = scmp.ne.s32.totalorder %s198, %s214
      %p216 = scmp.eq.s32.totalorder %s24, 0
      %p217 = por %p215, %p216
      %p218 = scmp.le.s32.totalorder 1, %s18
      %p219 = scmp.lt.s32.totalorder %s18, 5
      %p220 = pnand %p218, %p219
      %p221 = pneg %p220
      // Predicated region
      $region9: #{tpu_custom_call.1} parent=5 // pred_check
        _
      $region10: #{tpu_custom_call.1} parent=5 // pred_check_branch
        %223 = sbr.rel (%p220) target = $region12
      $region11: #{tpu_custom_call.1} parent=5 // pred_region
        %s224 = ssub.s32 %s18, 1
      $region12: #{tpu_custom_call.1} parent=5 // pred_fallthru
        _
      %p225 = scmp.lt.s32.totalorder %s18, 4
      // Predicated region
      $region13: #{tpu_custom_call.1} parent=5 // pred_check
        %p226 = pneg %p225
      $region14: #{tpu_custom_call.1} parent=5 // pred_check_branch
        %228 = sbr.rel (%p226) target = $region16
      $region15: #{tpu_custom_call.1} parent=5 // pred_region
        // Predicated region
        $region17: #{tpu_custom_call.1} parent=15 // pred_check
          %p229 = pneg %p58
        $region18: #{tpu_custom_call.1} parent=15 // pred_check_branch
          %231 = sbr.rel (%p229) target = $region20
        $region19: #{tpu_custom_call.1} parent=15 // pred_region
          %s232 = smul.u32 %s25, 2
          %s233 = sadd.s32 %s232, %s26
          %p234 = scmp.lt.s32.totalorder %s233, 2
          %s235 = scalar_select %p234, %s233, 2
          %p236 = scmp.lt.s32.totalorder %s235, 2
          %s237 = scalar_select %p236, %s235, 2
          %s238 = smul.addr %s237, 8
          %s239 = scalar_lea.vmem %s0, %s238
          %s240 = smul.u32 %s25, 2
          %s241 = sadd.s32 %s240, %s26
          %p242 = scmp.lt.s32.totalorder %s241, 2
          %s243 = scalar_select %p242, %s241, 2
        $region20: #{tpu_custom_call.1} parent=15 // pred_fallthru
          _
        // Predicated region
        $region21: #{tpu_custom_call.1} parent=15 // pred_check
          %p244 = pneg %p92
        $region22: #{tpu_custom_call.1} parent=15 // pred_check_branch
          %246 = sbr.rel (%p244) target = $region24
        $region23: #{tpu_custom_call.1} parent=15 // pred_region
          %s247 = smul.u32 %s25, 2
          %s248 = sadd.s32 %s247, %s26
          %p249 = scmp.lt.s32.totalorder %s248, 2
          %s250 = scalar_select %p249, %s248, 2
          %p251 = scmp.lt.s32.totalorder %s250, 2
          %s252 = scalar_select %p251, %s250, 2
          %s253 = smul.addr %s252, 8
          %s254 = scalar_lea.vmem %s1, %s253
          %s255 = smul.u32 %s25, 2
          %s256 = sadd.s32 %s255, %s26
          %p257 = scmp.lt.s32.totalorder %s256, 2
          %s258 = scalar_select %p257, %s256, 2
        $region24: #{tpu_custom_call.1} parent=15 // pred_fallthru
          _
        // Predicated region
        $region25: #{tpu_custom_call.1} parent=15 // pred_check
          %p259 = pneg %p126
        $region26: #{tpu_custom_call.1} parent=15 // pred_check_branch
          %261 = sbr.rel (%p259) target = $region28
        $region27: #{tpu_custom_call.1} parent=15 // pred_region
          %s262 = smul.u32 %s25, 2
          %s263 = sadd.s32 %s262, %s26
          %p264 = scmp.lt.s32.totalorder %s263, 2
          %s265 = scalar_select %p264, %s263, 2
          %p266 = scmp.lt.s32.totalorder %s265, 2
          %s267 = scalar_select %p266, %s265, 2
          %s268 = smul.addr %s267, 8
          %s269 = scalar_lea.vmem %s2, %s268
          %s270 = smul.u32 %s25, 2
          %s271 = sadd.s32 %s270, %s26
          %p272 = scmp.lt.s32.totalorder %s271, 2
          %s273 = scalar_select %p272, %s271, 2
        $region28: #{tpu_custom_call.1} parent=15 // pred_fallthru
          _
      $region16: #{tpu_custom_call.1} parent=5 // pred_fallthru
        _
      %p274 = scmp.le.s32.totalorder 1, %s18
      %p275 = scmp.lt.s32.totalorder %s18, 5
      %p276 = pnand %p274, %p275
      %p277 = pneg %p276
      // Predicated region
      $region29: #{tpu_custom_call.1} parent=5 // pred_check
        _
      $region30: #{tpu_custom_call.1} parent=5 // pred_check_branch
        %279 = sbr.rel (%p276) target = $region32
      $region31: #{tpu_custom_call.1} parent=5 // pred_region
        %s280 = ssub.s32 %s18, 1
        %s281 = smul.u32 %s27, 2
        %s282 = sadd.s32 %s281, %s28
        %p283 = scmp.lt.s32.totalorder %s282, 2
        %s284 = scalar_select %p283, %s282, 2
        %p285 = scmp.lt.s32.totalorder %s284, 2
        %s286 = scalar_select %p285, %s284, 2
        %s287 = smul.addr %s286, 8
        %s288 = scalar_lea.vmem %s0, %s287
        %p289 = pneg %p64
        %p290 = pneg %p61
        %s291 = smul.u32 %s27, 2
        %s292 = sadd.s32 %s291, %s28
        %p293 = scmp.lt.s32.totalorder %s292, 2
        %s294 = scalar_select %p293, %s292, 2
        %p295 = scmp.lt.s32.totalorder %s294, 2
        %s296 = scalar_select %p295, %s294, 2
        %s297 = smul.addr %s296, 8
        %s298 = scalar_lea.vmem %s1, %s297
        %p299 = pneg %p98
        %p300 = pneg %p95
        %s301 = smul.u32 %s27, 2
        %s302 = sadd.s32 %s301, %s28
        %p303 = scmp.lt.s32.totalorder %s302, 2
        %s304 = scalar_select %p303, %s302, 2
        %p305 = scmp.lt.s32.totalorder %s304, 2
        %s306 = scalar_select %p305, %s304, 2
        %s307 = smul.addr %s306, 8
        %s308 = scalar_lea.vmem %s2, %s307
        %p309 = pneg %p132
        %p310 = pneg %p129
        %p311 = pneg %p158
        %p312 = pneg %p155
        %s313 = sand.u32 %s145, 1
        %s314 = scalar_lea.sflag [#allocation6], %s313
        %s315 = sand.u32 %s145, 1
        %s316 = smul.addr %s315, 8
        %s317 = scalar_lea.vmem [#allocation5], %s316
        %p318 = pneg %p184
        %p319 = pneg %p181
        %s320 = sand.u32 %s23, 1
        %s321 = scalar_lea.sflag [#allocation8], %s320
        %s322 = sand.u32 %s171, 1
        %s323 = smul.addr %s322, 8
        %s324 = scalar_lea.vmem [#allocation7], %s323
        %p325 = pneg %p210
        %p326 = pneg %p207
        %s327 = sand.u32 %s23, 1
        %s328 = scalar_lea.sflag [#allocation8], %s327
        %s329 = sand.u32 %s197, 1
        %s330 = smul.addr %s329, 8
        %s331 = scalar_lea.vmem [#allocation9], %s330
        %s332 = smul.u32 %s27, 2
        %s333 = sadd.s32 %s332, %s28
        %p334 = scmp.lt.s32.totalorder %s333, 2
        %s335 = scalar_select %p334, %s333, 2
        %p336 = scmp.lt.s32.totalorder %s335, 2
        %s337 = scalar_select %p336, %s335, 2
        %s338 = smul.addr %s337, 8
        %s339 = scalar_lea.vmem %s0, %s338
        %s340 = smul.u32 %s27, 2
        %s341 = sadd.s32 %s340, %s28
        %p342 = scmp.lt.s32.totalorder %s341, 2
        %s343 = scalar_select %p342, %s341, 2
        %s344 = smul.u32 %s27, 2
        %s345 = sadd.s32 %s344, %s28
        %p346 = scmp.lt.s32.totalorder %s345, 2
        %s347 = scalar_select %p346, %s345, 2
        %p348 = scmp.lt.s32.totalorder %s347, 2
        %s349 = scalar_select %p348, %s347, 2
        %s350 = smul.addr %s349, 8
        %s351 = scalar_lea.vmem %s1, %s350
        %s352 = smul.u32 %s27, 2
        %s353 = sadd.s32 %s352, %s28
        %p354 = scmp.lt.s32.totalorder %s353, 2
        %s355 = scalar_select %p354, %s353, 2
        %s356 = smul.u32 %s27, 2
        %s357 = sadd.s32 %s356, %s28
        %p358 = scmp.lt.s32.totalorder %s357, 2
        %s359 = scalar_select %p358, %s357, 2
        %p360 = scmp.lt.s32.totalorder %s359, 2
        %s361 = scalar_select %p360, %s359, 2
        %s362 = smul.addr %s361, 8
        %s363 = scalar_lea.vmem %s2, %s362
        %s364 = smul.u32 %s27, 2
        %s365 = sadd.s32 %s364, %s28
        %p366 = scmp.lt.s32.totalorder %s365, 2
        %s367 = scalar_select %p366, %s365, 2
        %s368 = smul.u32 %s27, 2
        %s369 = sadd.s32 %s368, %s28
        %p370 = scmp.eq.s32.totalorder %s28, 0
        // Predicated region
        $region33: #{tpu_custom_call.1} parent=31 // pred_check
          %p371 = pneg %p370
        $region34: #{tpu_custom_call.1} parent=31 // pred_check_branch
          %373 = sbr.rel (%p371) target = $region36
        $region35: #{tpu_custom_call.1} parent=31 // pred_region
          %vm374 = vcmask 0
          %375 = vst.msk [vmem:[#allocation2] sm:$0x1] %vm374, 0.0
          %376 = vst [vmem:[#allocation3] sm:$0x1] 0.0
          %377 = vst [vmem:[#allocation4] sm:$0x1] 0.0
        $region36: #{tpu_custom_call.1} parent=31 // pred_fallthru
          _
        %v378 = vld [vmem:[%s339] sm:$0xff]
        %v379 = vld [vmem:[%s351] sm:$0xff]
        %s380 = smul.u32 %s369, 8
        %v381 = vlaneseq
        %v382 = vshrl.u32 %v381, 7
        %v383 = vstv %s380
        %v384 = vadd.s32 %v383, %v382
        %vm385 = vcmp.lt.s32.totalorder %v384, 20
        %v386 = vsel %vm385, 1, 0
        %vm387 = vcmp.eq.s32.totalorder %v386, 1
        %v388 = vsel %vm387, %v378, 0.0
        %v389 = vlaneseq
        %v390 = vand.u32 %v389, 127
        %391 = vset.pattern.permute.xlu0 0
        %392 = vperm.xlu0 %391, %v379
        %v393 = vpop.permute.xlu0 %392
        %vm394 = vcmp.eq.s32.totalorder %v390, %v393
        %vm395 = vcmask 261120
        %v396 = vsel %vm395, %v388, -inf
        %397 = vmax.xlane.f32.xlu0 %v396
        %v398 = vpop.xlane.xlu0 %397
        %v399 = vsub.f32 %v388, %v398
        %v400 = vmul.f32 %v399, 1.442695
        %v401 = vpow.pop %v400
        %v402 = vsel %vm394, 0.0, %v401
        %v403 = vsel %vm394, %v388, 0.0
        %v404 = vsel %vm395, %v403, 0.0
        %405 = vadd.xlane.f32.xlu0 %v404
        %v406 = vpop.xlane.xlu0 %405
        %v407 = vsel %vm395, %v402, 0.0
        %408 = vadd.xlane.f32.xlu0 %v407
        %v409 = vpop.xlane.xlu0 %408
        %v410 = vmul.f32 %v402, %v402
        %v411 = vsel %vm395, %v410, 0.0
        %412 = vadd.xlane.f32.xlu0 %v411
        %v413 = vpop.xlane.xlu0 %412
        %v414 = vsub.f32 %v406, %v398
        %v415 = vmul.f32 %v414, 1.442695
        %v416 = vpow.pop %v415
        %v417 = vadd.f32 %v409, %v416
        %v418 = vlog2.pop %v417
        %v419 = vmul.f32 %v418, 0.6931472
        %v420 = vadd.f32 %v419, %v398
        %v421 = vsub.f32 %v420, %v406
        %v422 = vsel %vm385, %v421, 0.0
        %v423 = vld [vmem:[#allocation2] sm:$0x1]
        %v424 = vrot.slane %v422, 4
        %v425 = vadd.f32 %v422, %v424
        %v426 = vrot.slane %v425, 2
        %v427 = vadd.f32 %v425, %v426
        %v428 = vrot.slane %v427, 1
        %v429 = vadd.f32 %v427, %v428
        %v430 = vadd.f32 %v423, %v429
        %vm431 = vcmask 0
        %432 = vst.msk [vmem:[#allocation2] sm:$0x1] %vm431, %v430
        %v433 = vrcp.pop %v417
        %v434 = vmul.f32 %v417, %v433
        %v435 = vsub.f32 1.0, %v434
        %v436 = vmul.f32 %v433, %v435
        %v437 = vadd.f32 %v433, %v436
        %vm438 = vweird.f32 %v417
        %vm439 = vweird.f32 %v433
        %vm440 = vmor %vm438, %vm439
        %v441 = vsel %vm440, %v433, %v437
        %v442 = vand.u32 2147483647, %v417
        %vm443 = vcmp.eq.f32.partialorder %v442, 8.507059e+37
        %v444 = vand.u32 %v417, 2147483648
        %v445 = vor.u32 1.1754944e-38, %v444
        %v446 = vsel %vm443, %v445, %v441
        %v447 = vmul.f32 1.0, %v446
        %v448 = vmul.f32 %v409, %v409
        %v449 = vadd.f32 %v413, %v448
        %v450 = vmul.f32 %v447, %v447
        %v451 = vmul.f32 %v449, %v450
        %v452 = vsel %vm385, %v451, 0.0
        %v453 = vld [vmem:[%s363] sm:$0xff]
        %454 = vset.pattern.permute.xlu0 0
        %455 = vperm.xlu0 %454, %v453
        %v456 = vpop.permute.xlu0 %455
        %vm457 = vcmp.eq.s32.totalorder %v390, %v456
        %vm458 = vmand %vm457, %vm387
        %v459 = vsel %vm458, 1, 0
        %v460 = vcvt.s32.f32 %v459
        %v461 = vld [vmem:[#allocation3] sm:$0x1]
        %v462 = vmul.f32 %v460, %v452
        %v463 = vrot.slane %v462, 4
        %v464 = vadd.f32 %v462, %v463
        %v465 = vrot.slane %v464, 2
        %v466 = vadd.f32 %v464, %v465
        %v467 = vrot.slane %v466, 1
        %v468 = vadd.f32 %v466, %v467
        %v469 = vadd.f32 %v461, %v468
        %470 = vst [vmem:[#allocation3] sm:$0x1] %v469
        %v471 = vld [vmem:[#allocation4] sm:$0x1]
        %v472 = vrot.slane %v460, 4
        %v473 = vadd.f32 %v460, %v472
        %v474 = vrot.slane %v473, 2
        %v475 = vadd.f32 %v473, %v474
        %v476 = vrot.slane %v475, 1
        %v477 = vadd.f32 %v475, %v476
        %v478 = vadd.f32 %v471, %v477
        %479 = vst [vmem:[#allocation4] sm:$0x1] %v478
        %p480 = scmp.eq.s32.totalorder %s28, 1
        // Predicated region
        $region37: #{tpu_custom_call.1} parent=31 // pred_check
          %p481 = pneg %p480
        $region38: #{tpu_custom_call.1} parent=31 // pred_check_branch
          %483 = sbr.rel (%p481) target = $region40
        $region39: #{tpu_custom_call.1} parent=31 // pred_region
          %v484 = vld [vmem:[#allocation3] sm:$0x1]
          %v486 = vperm.slane %v484, 0
          %488 = vst [vmem:[%s317] sm:$0xff] %v486
          %v489 = vld [vmem:[#allocation4] sm:$0x1]
          %v491 = vperm.slane %v489, 0
          %493 = vst [vmem:[%s324] sm:$0xff] %v491
          %v494 = vld [vmem:[#allocation2] sm:$0x1]
          %v496 = vperm.slane %v494, 0
          %497 = vset.pattern.permute.xlu0 0
          %498 = vperm.xlu0 %497, %v496
          %v499 = vpop.permute.xlu0 %498
          %501 = vst [vmem:[%s331] sm:$0xff] %v499
        $region40: #{tpu_custom_call.1} parent=31 // pred_fallthru
          _
        %s502 = sand.u32 %s145, 1
        %s503 = scalar_lea.sflag [#allocation6], %s502
        %s504 = sand.u32 %s145, 1
        %s505 = smul.addr %s504, 8
        %s506 = scalar_lea.vmem [#allocation5], %s505
        %s507 = sand.u32 %s23, 1
        %s508 = scalar_lea.sflag [#allocation8], %s507
        %s509 = sand.u32 %s171, 1
        %s510 = smul.addr %s509, 8
        %s511 = scalar_lea.vmem [#allocation7], %s510
        %s512 = sand.u32 %s23, 1
        %s513 = scalar_lea.sflag [#allocation8], %s512
        %s514 = sand.u32 %s197, 1
        %s515 = smul.addr %s514, 8
        %s516 = scalar_lea.vmem [#allocation9], %s515
        // Predicated region
        $region41: #{tpu_custom_call.1} parent=31 // pred_check
          %p517 = pneg %p155
        $region42: #{tpu_custom_call.1} parent=31 // pred_check_branch
          %519 = sbr.rel (%p517) target = $region44
        $region43: #{tpu_custom_call.1} parent=31 // pred_region
          %521 = vsyncadd %s503, 0
          %s522 = smul.addr %s27, 8
          %s523 = scalar_lea.hbm %s3, %s522
          %s525 = sshll.u32 %s506, 4
          %s526 = int_to_ptr.vmem [resolvable:$true] %s525
          %s527 = sshll.u32 %s523, 4
          %s528 = int_to_ptr.hbm [resolvable:$true] %s527
          %530 = dma.vmem_to_hbm [thread:$0]  %s526, 128, %s528, %s503
        $region44: #{tpu_custom_call.1} parent=31 // pred_fallthru
          _
        // Predicated region
        $region45: #{tpu_custom_call.1} parent=31 // pred_check
          %p531 = pneg %p181
        $region46: #{tpu_custom_call.1} parent=31 // pred_check_branch
          %533 = sbr.rel (%p531) target = $region48
        $region47: #{tpu_custom_call.1} parent=31 // pred_region
          %535 = vsyncadd %s508, 0
          %s536 = smul.addr %s27, 8
          %s537 = scalar_lea.hbm %s4, %s536
          %s539 = sshll.u32 %s511, 4
          %s540 = int_to_ptr.vmem [resolvable:$true] %s539
          %s541 = sshll.u32 %s537, 4
          %s542 = int_to_ptr.hbm [resolvable:$true] %s541
          %544 = dma.vmem_to_hbm [thread:$0]  %s540, 128, %s542, %s508
        $region48: #{tpu_custom_call.1} parent=31 // pred_fallthru
          _
        // Predicated region
        $region49: #{tpu_custom_call.1} parent=31 // pred_check
          %p545 = pneg %p207
        $region50: #{tpu_custom_call.1} parent=31 // pred_check_branch
          %547 = sbr.rel (%p545) target = $region52
        $region51: #{tpu_custom_call.1} parent=31 // pred_region
          %549 = vsyncadd %s513, 0
          %s550 = smul.addr %s27, 8
          %s551 = scalar_lea.hbm %s5, %s550
          %s553 = sshll.u32 %s516, 4
          %s554 = int_to_ptr.vmem [resolvable:$true] %s553
          %s555 = sshll.u32 %s551, 4
          %s556 = int_to_ptr.hbm [resolvable:$true] %s555
          %558 = dma.vmem_to_hbm [thread:$0]  %s554, 128, %s556, %s513
        $region52: #{tpu_custom_call.1} parent=31 // pred_fallthru
          _
      $region32: #{tpu_custom_call.1} parent=5 // pred_fallthru
        _
      %p559 = scmp.le.s32.totalorder 2, %s18
      // Predicated region
      $region53: #{tpu_custom_call.1} parent=5 // pred_check
        %p560 = pneg %p559
      $region54: #{tpu_custom_call.1} parent=5 // pred_check_branch
        %562 = sbr.rel (%p560) target = $region56
      $region55: #{tpu_custom_call.1} parent=5 // pred_region
        %s563 = ssub.s32 %s18, 2
        // Predicated region
        $region57: #{tpu_custom_call.1} parent=55 // pred_check
          %p564 = pneg %p161
        $region58: #{tpu_custom_call.1} parent=55 // pred_check_branch
          %566 = sbr.rel (%p564) target = $region60
        $region59: #{tpu_custom_call.1} parent=55 // pred_region
          %s567 = sand.u32 %s146, 1
          %s568 = scalar_lea.sflag [#allocation6], %s567
          %s569 = sand.u32 %s146, 1
          %s570 = smul.addr %s569, 8
          %s571 = scalar_lea.vmem [#allocation5], %s570
          %573 = dma.done %s568, 128
        $region60: #{tpu_custom_call.1} parent=55 // pred_fallthru
          _
        // Predicated region
        $region61: #{tpu_custom_call.1} parent=55 // pred_check
          %p574 = pneg %p187
        $region62: #{tpu_custom_call.1} parent=55 // pred_check_branch
          %576 = sbr.rel (%p574) target = $region64
        $region63: #{tpu_custom_call.1} parent=55 // pred_region
          %s577 = sand.u32 %s24, 1
          %s578 = scalar_lea.sflag [#allocation8], %s577
          %s579 = sand.u32 %s172, 1
          %s580 = smul.addr %s579, 8
          %s581 = scalar_lea.vmem [#allocation7], %s580
          %583 = dma.done %s578, 128
        $region64: #{tpu_custom_call.1} parent=55 // pred_fallthru
          _
        // Predicated region
        $region65: #{tpu_custom_call.1} parent=55 // pred_check
          %p584 = pneg %p213
        $region66: #{tpu_custom_call.1} parent=55 // pred_check_branch
          %586 = sbr.rel (%p584) target = $region68
        $region67: #{tpu_custom_call.1} parent=55 // pred_region
          %s587 = sand.u32 %s24, 1
          %s588 = scalar_lea.sflag [#allocation8], %s587
          %s589 = sand.u32 %s198, 1
          %s590 = smul.addr %s589, 8
          %s591 = scalar_lea.vmem [#allocation9], %s590
          %593 = dma.done %s588, 128
        $region68: #{tpu_custom_call.1} parent=55 // pred_fallthru
          _
      $region56: #{tpu_custom_call.1} parent=5 // pred_fallthru
        _
    $region6: #{tpu_custom_call.1} parent=1 // loop_footer
      %s22 = sadd.s32 1, %s18
    $region7: #{tpu_custom_call.1} parent=1 // loop_footer_branch
      %17 = sbr.rel target = $region3
    $region8: #{tpu_custom_call.1} parent=1 // loop_exit
      _
    %594 = vsyncpa [#allocation6], 1
    %s595 = scalar_lea.sflag [#allocation6], 1
    %596 = vsyncpa %s595, 1
    %597 = vsyncpa [#allocation8], 1
    %s598 = scalar_lea.sflag [#allocation8], 1
    %599 = vsyncpa %s598, 1

</llo_original>
